<compile_context>
chip_gen: v7x
topology: tpu7x:2x2x1
jax: 0.10.0
libtpu: 0.0.40
codegen_flags: <defaults>
</compile_context>

<pallas_src>
import jax
import jax.numpy as jnp
from jax.experimental import pallas as pl
from jax.experimental.pallas import tpu as pltpu


def _round_up(a, b):
    return ((a + b - 1) // b) * b


def _make_knn_kernel(x_idx_start, y_idx_start, y_bsize, tm, tn):
    """Kernel factory: static offsets / sizes are baked into the closure."""

    def kernel(x_ref, y_ref, xn_ref, yn_ref, cur_ref, out_ref, acc_ref):
        i = pl.program_id(0)          # x tile axis  ("parallel")
        j = pl.program_id(1)          # y tile axis  ("arbitrary" reduction)

        @pl.when(j == 0)
        def _():
            acc_ref[...] = jnp.full(acc_ref.shape, jnp.inf, acc_ref.dtype)

        # MXU: x_tile @ y_tile.T -> (TM, TN) with y rows on the lane axis.
        xy = jax.lax.dot_general(
            x_ref[...], y_ref[...],
            dimension_numbers=(((1,), (1,)), ((), ())),
            preferred_element_type=jnp.float32)
        d2 = xn_ref[...] + yn_ref[...] - 2.0 * xy   # (TM,1)+(1,TN)-(TM,TN)
        d2 = jnp.maximum(d2, 0.0)                   # cancellation clamp

        # Mask self pairs (global x index == global y index) and y padding.
        row_ids = (jax.lax.broadcasted_iota(jnp.int32, (tm, tn), 0)
                   + (x_idx_start + i * tm))
        col_ids = jax.lax.broadcasted_iota(jnp.int32, (tm, tn), 1) + j * tn
        mask = (row_ids == col_ids + y_idx_start) | (col_ids >= y_bsize)
        d2 = jnp.where(mask, jnp.inf, d2)

        # Running min of squared distances (sqrt deferred to finalize).
        acc_ref[...] = jnp.minimum(acc_ref[...],
                                   jnp.min(d2, axis=1, keepdims=True))

        @pl.when(j == pl.num_programs(1) - 1)
        def _():
            out_ref[...] = jnp.minimum(jnp.sqrt(acc_ref[...]), cur_ref[...])

    return kernel


def _choose_tiles(x_bsize, y_bsize, dp):
    """Pick (TM, TN, vmem_limit) so double-buffered tiles fit comfortably."""
    tm = min(256, _round_up(x_bsize, 8))
    tn = min(512, _round_up(y_bsize, 128))

    def tile_bytes(tm_, tn_):
        # double-buffered x / y / xn / yn / cur tiles + output + acc scratch
        return 4 * (2 * ((tm_ + tn_) * dp + 3 * tm_ + tn_) + 2 * tm_)

    budget = 32 << 20          # stay well inside v7x's 64 MiB physical VMEM
    while tile_bytes(tm, tn) > budget and tn > 128:
        tn //= 2
    while tile_bytes(tm, tn) > budget and tm > 8:
        tm //= 2
    # TODO(synk): tile the feature dim (3rd grid axis + (TM,TN) partial-xy
    # accumulator) if even the minimal (8, 128, Dp) tiles exceed the budget.
    vmem_limit = int(min(max(tile_bytes(tm, tn) + (8 << 20), 32 << 20),
                         64 << 20))
    return tm, tn, vmem_limit


def knn_forward(x, x_idx_start, y, y_idx_start, min_dists):
    """Functional equivalent of KNNComputer.forward for K == 1.

    x_idx_start / y_idx_start must be Python ints (they are static slice
    offsets in the PyTorch module as well).  Returns the updated min_dists.
    """
    x_bsize = x.shape[0]
    y_bsize = y.shape[0]
    xf = x.reshape(x_bsize, -1).astype(jnp.float32)     # (NX, D)
    yf = y.reshape(y_bsize, -1).astype(jnp.float32)     # (NY, D)
    D = xf.shape[1]
    Dp = _round_up(D, 128)

    TM, TN, vmem_limit = _choose_tiles(x_bsize, y_bsize, Dp)
    NXp = _round_up(x_bsize, TM)
    NYp = _round_up(y_bsize, TN)

    xf = jnp.pad(xf, ((0, NXp - x_bsize), (0, Dp - D)))
    yf = jnp.pad(yf, ((0, NYp - y_bsize), (0, Dp - D)))

    # Row norms precomputed once (outside the y-reduction loop).
    x_norm = jnp.sum(xf * xf, axis=1, keepdims=True)          # (NXp, 1)
    y_norm = jnp.sum(yf * yf, axis=1, keepdims=True).T        # (1, NYp)

    # Current buffer slice the forward pass updates (aliased onto the output).
    # TODO(synk): full in-place aliasing into min_dists (scalar-prefetched
    # x_idx_start driving the BlockSpec) would remove this slice/update copy.
    cur = jax.lax.dynamic_slice(min_dists, (x_idx_start,), (x_bsize,))
    cur = jnp.pad(cur.reshape(x_bsize, 1), ((0, NXp - x_bsize), (0, 0)),
                  constant_values=jnp.inf)                     # (NXp, 1)

    grid = (NXp // TM, NYp // TN)

    cost = pl.CostEstimate(
        flops=2 * NXp * NYp * Dp + 8 * NXp * NYp,
        transcendentals=NXp,
        bytes_accessed=4 * (NXp * Dp + grid[0] * NYp * Dp + 4 * NXp + NYp),
    )

    kernel = _make_knn_kernel(x_idx_start, y_idx_start, y_bsize, TM, TN)

    out = pl.pallas_call(
        kernel,
        out_shape=jax.ShapeDtypeStruct((NXp, 1), jnp.float32),
        grid_spec=pltpu.PrefetchScalarGridSpec(
            num_scalar_prefetch=0,
            grid=grid,
            in_specs=[
                pl.BlockSpec((TM, Dp), lambda i, j: (i, 0)),   # x tile
                pl.BlockSpec((TN, Dp), lambda i, j: (j, 0)),   # y tile
                pl.BlockSpec((TM, 1), lambda i, j: (i, 0)),    # ||x||^2
                pl.BlockSpec((1, TN), lambda i, j: (0, j)),    # ||y||^2
                pl.BlockSpec((TM, 1), lambda i, j: (i, 0)),    # current mins
            ],
            out_specs=pl.BlockSpec((TM, 1), lambda i, j: (i, 0)),
            scratch_shapes=[pltpu.VMEM((TM, 1), jnp.float32)],
        ),
        compiler_params=pltpu.CompilerParams(
            dimension_semantics=("parallel", "arbitrary"),
            vmem_limit_bytes=vmem_limit),
        cost_estimate=cost,
        input_output_aliases={4: 0},   # alias current-min input -> output
    )(xf, yf, x_norm, y_norm, cur)

    new_slice = out[:x_bsize, 0]
    return jax.lax.dynamic_update_slice(min_dists, new_slice, (x_idx_start,))


class KNNComputerJax:
    """Synthetic, functional re-implementation of KNNComputer (K == 1)."""

    def __init__(self, sample_num, K=1):
        assert K == 1, "only K == 1 implemented (see TODO above)"
        self.K = K
        self.num_computed = jnp.zeros([], jnp.float32)  # parity; unused here
        self.min_dists = jnp.full((sample_num,), jnp.inf, dtype=jnp.float32)

    def forward(self, x, x_idx_start, y, y_idx_start):
        self.min_dists = knn_forward(x, x_idx_start, y, y_idx_start,
                                     self.min_dists)

    def get_mean_nn_dist(self, sidx, eidx):
        return jnp.mean(self.min_dists[sidx:eidx])


def _reference_forward(x, x_idx_start, y, y_idx_start, min_dists):
    """Pure-jnp reference mirroring the PyTorch semantics (exact diff form)."""
    xb, yb = x.shape[0], y.shape[0]
    xf = x.reshape(xb, -1).astype(jnp.float32)
    yf = y.reshape(yb, -1).astype(jnp.float32)
    diff = xf[:, None, :] - yf[None, :, :]
    dist = jnp.sqrt(jnp.sum(diff * diff, axis=-1))
    xi = jnp.arange(x_idx_start, x_idx_start + xb)[:, None]
    yi = jnp.arange(y_idx_start, y_idx_start + yb)[None, :]
    dist = jnp.where(xi == yi, jnp.inf, dist)
    new_min = jnp.min(dist, axis=1)
    cur = min_dists[x_idx_start:x_idx_start + xb]
    return min_dists.at[x_idx_start:x_idx_start + xb].set(
        jnp.minimum(new_min, cur))


if __name__ == "__main__":
    key = jax.random.PRNGKey(0)
    kx, ky, ky2 = jax.random.split(key, 3)

    # Small shapes: batch=8, channels=4, spatial=16x16 -> D = 1024 features.
    x = jax.random.normal(kx, (8, 4, 16, 16), dtype=jnp.float32)
    y = jax.random.normal(ky, (8, 4, 16, 16), dtype=jnp.float32)
    y2 = jax.random.normal(ky2, (8, 4, 16, 16), dtype=jnp.float32)

    sample_num = 32
    x_idx_start = 0
    y_idx_start = 4    # overlapping global indices -> self-pair mask exercised
    y2_idx_start = 16  # disjoint chunk -> running-min fold exercised

    knn = KNNComputerJax(sample_num, K=1)
    knn.forward(x, x_idx_start, y, y_idx_start)
    knn.forward(x, x_idx_start, y2, y2_idx_start)
    result = jax.block_until_ready(knn.min_dists)

    # Silent self-check against a pure-JAX exact-difference reference.
    # Tolerance accounts for the matmul-based distance decomposition.
    ref = _reference_forward(
        x, x_idx_start, y, y_idx_start,
        jnp.full((sample_num,), jnp.inf, dtype=jnp.float32))
    ref = _reference_forward(x, x_idx_start, y2, y2_idx_start, ref)
    assert jnp.allclose(result[:8], ref[:8], rtol=1e-2, atol=1e-2)
    assert bool(jnp.all(jnp.isinf(result[8:])))

    print("KERNEL_OK")
</pallas_src>

<mosaic_0001>
module attributes {stable_mosaic.version = 11 : i64} {
  func.func @kernel(%arg0: i32, %arg1: i32, %arg2: memref<8x1024xf32, #tpu.memory_space<vmem>>, %arg3: memref<128x1024xf32, #tpu.memory_space<vmem>>, %arg4: memref<8x1xf32, #tpu.memory_space<vmem>>, %arg5: memref<1x128xf32, #tpu.memory_space<vmem>>, %arg6: memref<8x1xf32, #tpu.memory_space<vmem>>, %arg7: memref<8x1xf32, #tpu.memory_space<vmem>>, %arg8: memref<8x1xf32, #tpu.memory_space<vmem>>) attributes {dimension_semantics = [#tpu.dimension_semantics<parallel>, #tpu.dimension_semantics<arbitrary>], iteration_bounds = array<i64: 1, 1>, scalar_prefetch = 0 : i64, scratch_operands = 1 : i64, tpu.core_type = #tpu.core_type<tc>, window_params = [{transform_indices = @transform_0, window_bounds = array<i64: 8, 1024>}, {transform_indices = @transform_1, window_bounds = array<i64: 128, 1024>}, {transform_indices = @transform_2, window_bounds = array<i64: 8, 1>}, {transform_indices = @transform_3, window_bounds = array<i64: 1, 128>}, {transform_indices = @transform_4, window_bounds = array<i64: 8, 1>}, {transform_indices = @transform_5, window_bounds = array<i64: 8, 1>}]} {
    %c0_i32 = arith.constant 0 : i32
    %0 = arith.cmpi eq, %arg1, %c0_i32 : i32
    %1 = arith.extui %0 : i1 to i32
    %c0_i32_0 = arith.constant 0 : i32
    %2 = arith.cmpi ne, %1, %c0_i32_0 : i32
    scf.if %2 {
      %cst_20 = arith.constant 0x7F800000 : f32
      %41 = vector.broadcast %cst_20 : f32 to vector<8x1xf32>
      %c0_21 = arith.constant 0 : index
      %c0_22 = arith.constant 0 : index
      %42 = vector.load %arg8[%c0_21, %c0_22] : memref<8x1xf32, #tpu.memory_space<vmem>>, vector<8x1xf32>
      tpu.vector_store %arg8[%c0_21, %c0_22], %41 {strides = array<i32>} : memref<8x1xf32, #tpu.memory_space<vmem>>, vector<8x1xf32>,
    } else {
    }
    %c0 = arith.constant 0 : index
    %c0_1 = arith.constant 0 : index
    %3 = vector.load %arg2[%c0, %c0_1] : memref<8x1024xf32, #tpu.memory_space<vmem>>, vector<8x1024xf32>
    %c0_2 = arith.constant 0 : index
    %c0_3 = arith.constant 0 : index
    %4 = vector.load %arg3[%c0_2, %c0_3] : memref<128x1024xf32, #tpu.memory_space<vmem>>, vector<128x1024xf32>
    %cst = arith.constant dense<0.000000e+00> : vector<8x128xf32>
    %5 = tpu.matmul %3, %4, %cst {dimension_numbers = #tpu.dot_dimension_numbers<[1], [1], [0], [0], [0, 0, 1, 0], [], []>} : vector<8x1024xf32>, vector<128x1024xf32>, vector<8x128xf32> -> vector<8x128xf32>
    %c0_4 = arith.constant 0 : index
    %c0_5 = arith.constant 0 : index
    %6 = vector.load %arg4[%c0_4, %c0_5] : memref<8x1xf32, #tpu.memory_space<vmem>>, vector<8x1xf32>
    %c0_6 = arith.constant 0 : index
    %c0_7 = arith.constant 0 : index
    %7 = vector.load %arg5[%c0_6, %c0_7] : memref<1x128xf32, #tpu.memory_space<vmem>>, vector<1x128xf32>
    %8 = vector.broadcast %6 : vector<8x1xf32> to vector<8x128xf32>
    %9 = vector.broadcast %7 : vector<1x128xf32> to vector<8x128xf32>
    %10 = arith.addf %8, %9 : vector<8x128xf32>
    %cst_8 = arith.constant 2.000000e+00 : f32
    %11 = vector.broadcast %cst_8 : f32 to vector<8x128xf32>
    %12 = arith.mulf %11, %5 : vector<8x128xf32>
    %13 = arith.subf %10, %12 : vector<8x128xf32>
    %cst_9 = arith.constant 0.000000e+00 : f32
    %14 = vector.broadcast %cst_9 : f32 to vector<8x128xf32>
    %15 = arith.maximumf %13, %14 : vector<8x128xf32>
    %16 = tpu.iota {dimensions = array<i32: 0>} : vector<8x128xi32>
    %c8_i32 = arith.constant 8 : i32
    %17 = arith.muli %arg0, %c8_i32 : i32
    %c0_i32_10 = arith.constant 0 : i32
    %18 = arith.addi %c0_i32_10, %17 : i32
    %19 = vector.broadcast %18 : i32 to vector<8x128xi32>
    %20 = arith.addi %16, %19 : vector<8x128xi32>
    %21 = tpu.iota {dimensions = array<i32: 1>} : vector<8x128xi32>
    %c128_i32 = arith.constant 128 : i32
    %22 = arith.muli %arg1, %c128_i32 : i32
    %23 = vector.broadcast %22 : i32 to vector<8x128xi32>
    %24 = arith.addi %21, %23 : vector<8x128xi32>
    %c4_i32 = arith.constant 4 : i32
    %25 = vector.broadcast %c4_i32 : i32 to vector<8x128xi32>
    %26 = arith.addi %24, %25 : vector<8x128xi32>
    %27 = arith.cmpi eq, %20, %26 : vector<8x128xi32>
    %c8_i32_11 = arith.constant 8 : i32
    %28 = vector.broadcast %c8_i32_11 : i32 to vector<8x128xi32>
    %29 = arith.cmpi sge, %24, %28 : vector<8x128xi32>
    %30 = arith.ori %27, %29 : vector<8x128xi1>
    %cst_12 = arith.constant 0x7F800000 : f32
    %31 = vector.broadcast %cst_12 : f32 to vector<8x128xf32>
    %32 = arith.select %30, %31, %15 : vector<8x128xi1>, vector<8x128xf32>
    %c0_13 = arith.constant 0 : index
    %c0_14 = arith.constant 0 : index
    %33 = vector.load %arg8[%c0_13, %c0_14] : memref<8x1xf32, #tpu.memory_space<vmem>>, vector<8x1xf32>
    %cst_15 = arith.constant dense<0x7F800000> : vector<8xf32>
    %34 = vector.multi_reduction <minimumf>, %32, %cst_15 [1] : vector<8x128xf32> to vector<8xf32>
    %35 = vector.shape_cast %34 : vector<8xf32> to vector<8x1xf32>
    %36 = arith.minimumf %33, %35 : vector<8x1xf32>
    %c0_16 = arith.constant 0 : index
    %c0_17 = arith.constant 0 : index
    %37 = vector.load %arg8[%c0_16, %c0_17] : memref<8x1xf32, #tpu.memory_space<vmem>>, vector<8x1xf32>
    tpu.vector_store %arg8[%c0_16, %c0_17], %36 {strides = array<i32>} : memref<8x1xf32, #tpu.memory_space<vmem>>, vector<8x1xf32>,
    %c0_i32_18 = arith.constant 0 : i32
    %38 = arith.cmpi eq, %arg1, %c0_i32_18 : i32
    %39 = arith.extui %38 : i1 to i32
    %c0_i32_19 = arith.constant 0 : i32
    %40 = arith.cmpi ne, %39, %c0_i32_19 : i32
    scf.if %40 {
      %c0_20 = arith.constant 0 : index
      %c0_21 = arith.constant 0 : index
      %41 = vector.load %arg8[%c0_20, %c0_21] : memref<8x1xf32, #tpu.memory_space<vmem>>, vector<8x1xf32>
      %42 = math.sqrt %41 : vector<8x1xf32>
      %c0_22 = arith.constant 0 : index
      %c0_23 = arith.constant 0 : index
      %43 = vector.load %arg6[%c0_22, %c0_23] : memref<8x1xf32, #tpu.memory_space<vmem>>, vector<8x1xf32>
      %44 = arith.minimumf %42, %43 : vector<8x1xf32>
      %c0_24 = arith.constant 0 : index
      %c0_25 = arith.constant 0 : index
      %45 = vector.load %arg7[%c0_24, %c0_25] : memref<8x1xf32, #tpu.memory_space<vmem>>, vector<8x1xf32>
      tpu.vector_store %arg7[%c0_24, %c0_25], %44 {strides = array<i32>} : memref<8x1xf32, #tpu.memory_space<vmem>>, vector<8x1xf32>,
    } else {
    }
    return
  }
  func.func @transform_0(%arg0: i32, %arg1: i32) -> (i32, i32) {
    %c0_i32 = arith.constant 0 : i32
    %c0_i32_0 = arith.constant 0 : i32
    return %arg0, %c0_i32 : i32, i32
  }
  func.func @transform_1(%arg0: i32, %arg1: i32) -> (i32, i32) {
    %c0_i32 = arith.constant 0 : i32
    %c0_i32_0 = arith.constant 0 : i32
    return %arg1, %c0_i32 : i32, i32
  }
  func.func @transform_2(%arg0: i32, %arg1: i32) -> (i32, i32) {
    %c0_i32 = arith.constant 0 : i32
    %c0_i32_0 = arith.constant 0 : i32
    return %arg0, %c0_i32 : i32, i32
  }
  func.func @transform_3(%arg0: i32, %arg1: i32) -> (i32, i32) {
    %c0_i32 = arith.constant 0 : i32
    %c0_i32_0 = arith.constant 0 : i32
    return %c0_i32, %arg1 : i32, i32
  }
  func.func @transform_4(%arg0: i32, %arg1: i32) -> (i32, i32) {
    %c0_i32 = arith.constant 0 : i32
    %c0_i32_0 = arith.constant 0 : i32
    return %arg0, %c0_i32 : i32, i32
  }
  func.func @transform_5(%arg0: i32, %arg1: i32) -> (i32, i32) {
    %c0_i32 = arith.constant 0 : i32
    %c0_i32_0 = arith.constant 0 : i32
    return %arg0, %c0_i32 : i32, i32
  }
}

</mosaic_0001>

<llo_original>
// kernel: tpu_custom_call.1
$region0: #{tpu_custom_call.1}
  #allocation0 [shape = 'u32[]', space=smem, size = 0x4, offset = 0x4, fixed_abs, tag = 'smem constant byte address 0x4 - core index']
  #allocation1 [shape = 'u32[144,128]{1,0:T(1,128)}', space=vmem, size = 0x12000, scoped, tag = 'internal scratch']
  #allocation2 [shape = 'f32[8,1]{1,0:T(8,128)}', space=vmem, size = 0x1000, scoped, tag = 'scratch operand']
  %s0 = inlined_call_operand.hbm [shape: f32[8,1024], index: 0, kind: input, shape index: {}]
  %s1 = inlined_call_operand.hbm [shape: f32[128,1024], index: 1, kind: input, shape index: {}]
  %s2 = inlined_call_operand.vmem [shape: f32[8,1], index: 2, kind: input, shape index: {}]
  %s3 = inlined_call_operand.vmem [shape: f32[1,128], index: 3, kind: input, shape index: {}]
  %s4 = inlined_call_operand.vmem [shape: f32[8,1], index: 4, kind: input, shape index: {}, may-alias: {4,5}]
  %s5 = inlined_call_operand.vmem [shape: f32[8,1], index: 5, kind: output, shape index: {}, may-alias: {4,5}]
  %s6 = sld [smem:[#allocation0]]
  $region46: #{tpu_custom_call.1} parent=0
    _
  %s8 = ssub.s32 1, %s6
  %s9 = scalar_select 0, %s8, %s6
  $region1: #{tpu_custom_call.1} parent=0
    #allocation3 [shape = 'u8[32768]{0}', space=vmem, size = 0x8000, scoped, tag = 'input window, operand 0, single buffered']
    #allocation4 [shape = 's32[1]{0}', space=sflag, size = 0x4, scoped, tag = 'scoped memory for tpu_custom_call.1']
    #allocation5 [shape = 'u8[524288]{0}', space=vmem, size = 0x80000, scoped, tag = 'input window, operand 1, single buffered']
    #allocation6 [shape = 's32[1]{0}', space=sflag, size = 0x4, scoped, tag = 'scoped memory for tpu_custom_call.1']
    %10 = vsyncpa [#allocation4], 0
    %11 = vsyncpa [#allocation6], 0
    // Predicated region
    $region2: #{tpu_custom_call.1} parent=1 // pred_check
      _
    $region3: #{tpu_custom_call.1} parent=1 // pred_check_branch
      %13 = sbr.rel (0) target = $region5
    $region4: #{tpu_custom_call.1} parent=1 // pred_region
      %s15 = ssub.s32 1024, 1024
      %16 = vsyncadd [#allocation4], %s15
      %s18 = sshll.u32 [#allocation3], 4
      %s19 = int_to_ptr.vmem [resolvable:$true] %s18
      %21 = dma.hbm_to_vmem [thread:$0]  %s0, 1024, %s19, [#allocation4]
    $region5: #{tpu_custom_call.1} parent=1 // pred_fallthru
      _
    // Predicated region
    $region6: #{tpu_custom_call.1} parent=1 // pred_check
      _
    $region7: #{tpu_custom_call.1} parent=1 // pred_check_branch
      %23 = sbr.rel (0) target = $region9
    $region8: #{tpu_custom_call.1} parent=1 // pred_region
      %s25 = ssub.s32 16384, 16384
      %26 = vsyncadd [#allocation6], %s25
      %s27 = sshll.u32 [#allocation5], 4
      %s28 = int_to_ptr.vmem [resolvable:$true] %s27
      %33 = dma.hbm_to_vmem [thread:$0]  %s1, 16384, %s28, [#allocation6], 1024, 1024, 64
    $region9: #{tpu_custom_call.1} parent=1 // pred_fallthru
      _
    // Predicated region
    $region10: #{tpu_custom_call.1} parent=1 // pred_check
      _
    $region11: #{tpu_custom_call.1} parent=1 // pred_check_branch
      %35 = sbr.rel (0) target = $region13
    $region12: #{tpu_custom_call.1} parent=1 // pred_region
      _
    $region13: #{tpu_custom_call.1} parent=1 // pred_fallthru
      _
    // Predicated region
    $region14: #{tpu_custom_call.1} parent=1 // pred_check
      _
    $region15: #{tpu_custom_call.1} parent=1 // pred_check_branch
      %37 = sbr.rel (0) target = $region17
    $region16: #{tpu_custom_call.1} parent=1 // pred_region
      _
    $region17: #{tpu_custom_call.1} parent=1 // pred_fallthru
      _
    // Predicated region
    $region18: #{tpu_custom_call.1} parent=1 // pred_check
      _
    $region19: #{tpu_custom_call.1} parent=1 // pred_check_branch
      %39 = sbr.rel (0) target = $region21
    $region20: #{tpu_custom_call.1} parent=1 // pred_region
      _
    $region21: #{tpu_custom_call.1} parent=1 // pred_fallthru
      _
    // Predicated region
    $region22: #{tpu_custom_call.1} parent=1 // pred_check
      _
    $region23: #{tpu_custom_call.1} parent=1 // pred_check_branch
      %41 = sbr.rel (0) target = $region25
    $region24: #{tpu_custom_call.1} parent=1 // pred_region
      %42 = dma.done [#allocation4], 1024
    $region25: #{tpu_custom_call.1} parent=1 // pred_fallthru
      _
    // Predicated region
    $region26: #{tpu_custom_call.1} parent=1 // pred_check
      _
    $region27: #{tpu_custom_call.1} parent=1 // pred_check_branch
      %44 = sbr.rel (0) target = $region29
    $region28: #{tpu_custom_call.1} parent=1 // pred_region
      %45 = dma.done [#allocation6], 16384
    $region29: #{tpu_custom_call.1} parent=1 // pred_fallthru
      _
    %p46 = scmp.eq.s32.totalorder 0, 0
    // Predicated region
    $region30: #{tpu_custom_call.1} parent=1 // pred_check
      %p47 = pneg %p46
    $region31: #{tpu_custom_call.1} parent=1 // pred_check_branch
      %49 = sbr.rel (%p47) target = $region33
    $region32: #{tpu_custom_call.1} parent=1 // pred_region
      %vm50 = vcmask 7168
      %51 = vst.msk [vmem:[#allocation2] sm:$0xff] %vm50, inf
    $region33: #{tpu_custom_call.1} parent=1 // pred_fallthru
      _
    %v52 = vld [vmem:[#allocation3] sm:$0xff]
    %v53 = vld [vmem:[#allocation3 + $0x8] sm:$0xff]
    %v54 = vld [vmem:[#allocation3 + $0x10] sm:$0xff]
    %v55 = vld [vmem:[#allocation3 + $0x18] sm:$0xff]
    %v56 = vld [vmem:[#allocation3 + $0x20] sm:$0xff]
    %v57 = vld [vmem:[#allocation3 + $0x28] sm:$0xff]
    %v58 = vld [vmem:[#allocation3 + $0x30] sm:$0xff]
    %v59 = vld [vmem:[#allocation3 + $0x38] sm:$0xff]
    %v60 = vld [vmem:[#allocation5] sm:$0xff]
    %v61 = vld [vmem:[#allocation5 + $0x8] sm:$0xff]
    %v62 = vld [vmem:[#allocation5 + $0x10] sm:$0xff]
    %v63 = vld [vmem:[#allocation5 + $0x18] sm:$0xff]
    %v64 = vld [vmem:[#allocation5 + $0x20] sm:$0xff]
    %v65 = vld [vmem:[#allocation5 + $0x28] sm:$0xff]
    %v66 = vld [vmem:[#allocation5 + $0x30] sm:$0xff]
    %v67 = vld [vmem:[#allocation5 + $0x38] sm:$0xff]
    %v68 = vld [vmem:[#allocation5 + $0x40] sm:$0xff]
    %v69 = vld [vmem:[#allocation5 + $0x48] sm:$0xff]
    %v70 = vld [vmem:[#allocation5 + $0x50] sm:$0xff]
    %v71 = vld [vmem:[#allocation5 + $0x58] sm:$0xff]
    %v72 = vld [vmem:[#allocation5 + $0x60] sm:$0xff]
    %v73 = vld [vmem:[#allocation5 + $0x68] sm:$0xff]
    %v74 = vld [vmem:[#allocation5 + $0x70] sm:$0xff]
    %v75 = vld [vmem:[#allocation5 + $0x78] sm:$0xff]
    %v76 = vld [vmem:[#allocation5 + $0x80] sm:$0xff]
    %v77 = vld [vmem:[#allocation5 + $0x88] sm:$0xff]
    %v78 = vld [vmem:[#allocation5 + $0x90] sm:$0xff]
    %v79 = vld [vmem:[#allocation5 + $0x98] sm:$0xff]
    %v80 = vld [vmem:[#allocation5 + $0xa0] sm:$0xff]
    %v81 = vld [vmem:[#allocation5 + $0xa8] sm:$0xff]
    %v82 = vld [vmem:[#allocation5 + $0xb0] sm:$0xff]
    %v83 = vld [vmem:[#allocation5 + $0xb8] sm:$0xff]
    %v84 = vld [vmem:[#allocation5 + $0xc0] sm:$0xff]
    %v85 = vld [vmem:[#allocation5 + $0xc8] sm:$0xff]
    %v86 = vld [vmem:[#allocation5 + $0xd0] sm:$0xff]
    %v87 = vld [vmem:[#allocation5 + $0xd8] sm:$0xff]
    %v88 = vld [vmem:[#allocation5 + $0xe0] sm:$0xff]
    %v89 = vld [vmem:[#allocation5 + $0xe8] sm:$0xff]
    %v90 = vld [vmem:[#allocation5 + $0xf0] sm:$0xff]
    %v91 = vld [vmem:[#allocation5 + $0xf8] sm:$0xff]
    %v92 = vld [vmem:[#allocation5 + $0x100] sm:$0xff]
    %v93 = vld [vmem:[#allocation5 + $0x108] sm:$0xff]
    %v94 = vld [vmem:[#allocation5 + $0x110] sm:$0xff]
    %v95 = vld [vmem:[#allocation5 + $0x118] sm:$0xff]
    %v96 = vld [vmem:[#allocation5 + $0x120] sm:$0xff]
    %v97 = vld [vmem:[#allocation5 + $0x128] sm:$0xff]
    %v98 = vld [vmem:[#allocation5 + $0x130] sm:$0xff]
    %v99 = vld [vmem:[#allocation5 + $0x138] sm:$0xff]
    %v100 = vld [vmem:[#allocation5 + $0x140] sm:$0xff]
    %v101 = vld [vmem:[#allocation5 + $0x148] sm:$0xff]
    %v102 = vld [vmem:[#allocation5 + $0x150] sm:$0xff]
    %v103 = vld [vmem:[#allocation5 + $0x158] sm:$0xff]
    %v104 = vld [vmem:[#allocation5 + $0x160] sm:$0xff]
    %v105 = vld [vmem:[#allocation5 + $0x168] sm:$0xff]
    %v106 = vld [vmem:[#allocation5 + $0x170] sm:$0xff]
    %v107 = vld [vmem:[#allocation5 + $0x178] sm:$0xff]
    %v108 = vld [vmem:[#allocation5 + $0x180] sm:$0xff]
    %v109 = vld [vmem:[#allocation5 + $0x188] sm:$0xff]
    %v110 = vld [vmem:[#allocation5 + $0x190] sm:$0xff]
    %v111 = vld [vmem:[#allocation5 + $0x198] sm:$0xff]
    %v112 = vld [vmem:[#allocation5 + $0x1a0] sm:$0xff]
    %v113 = vld [vmem:[#allocation5 + $0x1a8] sm:$0xff]
    %v114 = vld [vmem:[#allocation5 + $0x1b0] sm:$0xff]
    %v115 = vld [vmem:[#allocation5 + $0x1b8] sm:$0xff]
    %v116 = vld [vmem:[#allocation5 + $0x1c0] sm:$0xff]
    %v117 = vld [vmem:[#allocation5 + $0x1c8] sm:$0xff]
    %v118 = vld [vmem:[#allocation5 + $0x1d0] sm:$0xff]
    %v119 = vld [vmem:[#allocation5 + $0x1d8] sm:$0xff]
    %v120 = vld [vmem:[#allocation5 + $0x1e0] sm:$0xff]
    %v121 = vld [vmem:[#allocation5 + $0x1e8] sm:$0xff]
    %v122 = vld [vmem:[#allocation5 + $0x1f0] sm:$0xff]
    %v123 = vld [vmem:[#allocation5 + $0x1f8] sm:$0xff]
    %v124 = vld [vmem:[#allocation5 + $0x200] sm:$0xff]
    %v125 = vld [vmem:[#allocation5 + $0x208] sm:$0xff]
    %v126 = vld [vmem:[#allocation5 + $0x210] sm:$0xff]
    %v127 = vld [vmem:[#allocation5 + $0x218] sm:$0xff]
    %v128 = vld [vmem:[#allocation5 + $0x220] sm:$0xff]
    %v129 = vld [vmem:[#allocation5 + $0x228] sm:$0xff]
    %v130 = vld [vmem:[#allocation5 + $0x230] sm:$0xff]
    %v131 = vld [vmem:[#allocation5 + $0x238] sm:$0xff]
    %v132 = vld [vmem:[#allocation5 + $0x240] sm:$0xff]
    %v133 = vld [vmem:[#allocation5 + $0x248] sm:$0xff]
    %v134 = vld [vmem:[#allocation5 + $0x250] sm:$0xff]
    %v135 = vld [vmem:[#allocation5 + $0x258] sm:$0xff]
    %v136 = vld [vmem:[#allocation5 + $0x260] sm:$0xff]
    %v137 = vld [vmem:[#allocation5 + $0x268] sm:$0xff]
    %v138 = vld [vmem:[#allocation5 + $0x270] sm:$0xff]
    %v139 = vld [vmem:[#allocation5 + $0x278] sm:$0xff]
    %v140 = vld [vmem:[#allocation5 + $0x280] sm:$0xff]
    %v141 = vld [vmem:[#allocation5 + $0x288] sm:$0xff]
    %v142 = vld [vmem:[#allocation5 + $0x290] sm:$0xff]
    %v143 = vld [vmem:[#allocation5 + $0x298] sm:$0xff]
    %v144 = vld [vmem:[#allocation5 + $0x2a0] sm:$0xff]
    %v145 = vld [vmem:[#allocation5 + $0x2a8] sm:$0xff]
    %v146 = vld [vmem:[#allocation5 + $0x2b0] sm:$0xff]
    %v147 = vld [vmem:[#allocation5 + $0x2b8] sm:$0xff]
    %v148 = vld [vmem:[#allocation5 + $0x2c0] sm:$0xff]
    %v149 = vld [vmem:[#allocation5 + $0x2c8] sm:$0xff]
    %v150 = vld [vmem:[#allocation5 + $0x2d0] sm:$0xff]
    %v151 = vld [vmem:[#allocation5 + $0x2d8] sm:$0xff]
    %v152 = vld [vmem:[#allocation5 + $0x2e0] sm:$0xff]
    %v153 = vld [vmem:[#allocation5 + $0x2e8] sm:$0xff]
    %v154 = vld [vmem:[#allocation5 + $0x2f0] sm:$0xff]
    %v155 = vld [vmem:[#allocation5 + $0x2f8] sm:$0xff]
    %v156 = vld [vmem:[#allocation5 + $0x300] sm:$0xff]
    %v157 = vld [vmem:[#allocation5 + $0x308] sm:$0xff]
    %v158 = vld [vmem:[#allocation5 + $0x310] sm:$0xff]
    %v159 = vld [vmem:[#allocation5 + $0x318] sm:$0xff]
    %v160 = vld [vmem:[#allocation5 + $0x320] sm:$0xff]
    %v161 = vld [vmem:[#allocation5 + $0x328] sm:$0xff]
    %v162 = vld [vmem:[#allocation5 + $0x330] sm:$0xff]
    %v163 = vld [vmem:[#allocation5 + $0x338] sm:$0xff]
    %v164 = vld [vmem:[#allocation5 + $0x340] sm:$0xff]
    %v165 = vld [vmem:[#allocation5 + $0x348] sm:$0xff]
    %v166 = vld [vmem:[#allocation5 + $0x350] sm:$0xff]
    %v167 = vld [vmem:[#allocation5 + $0x358] sm:$0xff]
    %v168 = vld [vmem:[#allocation5 + $0x360] sm:$0xff]
    %v169 = vld [vmem:[#allocation5 + $0x368] sm:$0xff]
    %v170 = vld [vmem:[#allocation5 + $0x370] sm:$0xff]
    %v171 = vld [vmem:[#allocation5 + $0x378] sm:$0xff]
    %v172 = vld [vmem:[#allocation5 + $0x380] sm:$0xff]
    %v173 = vld [vmem:[#allocation5 + $0x388] sm:$0xff]
    %v174 = vld [vmem:[#allocation5 + $0x390] sm:$0xff]
    %v175 = vld [vmem:[#allocation5 + $0x398] sm:$0xff]
    %v176 = vld [vmem:[#allocation5 + $0x3a0] sm:$0xff]
    %v177 = vld [vmem:[#allocation5 + $0x3a8] sm:$0xff]
    %v178 = vld [vmem:[#allocation5 + $0x3b0] sm:$0xff]
    %v179 = vld [vmem:[#allocation5 + $0x3b8] sm:$0xff]
    %v180 = vld [vmem:[#allocation5 + $0x3c0] sm:$0xff]
    %v181 = vld [vmem:[#allocation5 + $0x3c8] sm:$0xff]
    %v182 = vld [vmem:[#allocation5 + $0x3d0] sm:$0xff]
    %v183 = vld [vmem:[#allocation5 + $0x3d8] sm:$0xff]
    %v184 = vld [vmem:[#allocation5 + $0x3e0] sm:$0xff]
    %v185 = vld [vmem:[#allocation5 + $0x3e8] sm:$0xff]
    %v186 = vld [vmem:[#allocation5 + $0x3f0] sm:$0xff]
    %v187 = vld [vmem:[#allocation5 + $0x3f8] sm:$0xff]
    %188 = vmatprep.subr.mxu0 %v61
    %189 = vmatpush1.xpose.msra.mxu0 %v60
    %190 = vmatprep.subr.mxu0 %v69
    %191 = vmatpush1.xpose.msra.mxu0 %v68
    %192 = vmatprep.subr.mxu0 %v77
    %193 = vmatpush1.xpose.msra.mxu0 %v76
    %194 = vmatprep.subr.mxu0 %v85
    %195 = vmatpush1.xpose.msra.mxu0 %v84
    %196 = vmatprep.subr.mxu0 %v93
    %197 = vmatpush1.xpose.msra.mxu0 %v92
    %198 = vmatprep.subr.mxu0 %v101
    %199 = vmatpush1.xpose.msra.mxu0 %v100
    %200 = vmatprep.subr.mxu0 %v109
    %201 = vmatpush1.xpose.msra.mxu0 %v108
    %202 = vmatprep.subr.mxu0 %v117
    %203 = vmatpush1.xpose.msra.mxu0 %v116
    %204 = vmatprep.subr.mxu0 %v125
    %205 = vmatpush1.xpose.msra.mxu0 %v124
    %206 = vmatprep.subr.mxu0 %v133
    %207 = vmatpush1.xpose.msra.mxu0 %v132
    %208 = vmatprep.subr.mxu0 %v141
    %209 = vmatpush1.xpose.msra.mxu0 %v140
    %210 = vmatprep.subr.mxu0 %v149
    %211 = vmatpush1.xpose.msra.mxu0 %v148
    %212 = vmatprep.subr.mxu0 %v157
    %213 = vmatpush1.xpose.msra.mxu0 %v156
    %214 = vmatprep.subr.mxu0 %v165
    %215 = vmatpush1.xpose.msra.mxu0 %v164
    %216 = vmatprep.subr.mxu0 %v173
    %217 = vmatpush1.xpose.msra.mxu0 %v172
    %218 = vmatprep.subr.mxu0 %v181
    %219 = vmatpush1.xpose.msra.mxu0 %v180
    %220 = vmatprep.subr.mxu0 0.0
    %221 = vmatpush1.xpose.msra.mxu0 0.0
    %222 = vmatprep.subr.mxu0 0.0
    %223 = vmatpush1.xpose.msra.mxu0 0.0
    %224 = vmatprep.subr.mxu0 0.0
    %225 = vmatpush1.xpose.msra.mxu0 0.0
    %226 = vmatprep.subr.mxu0 0.0
    %227 = vmatpush1.xpose.msra.mxu0 0.0
    %228 = vmatprep.subr.mxu0 0.0
    %229 = vmatpush1.xpose.msra.mxu0 0.0
    %230 = vmatprep.subr.mxu0 0.0
    %231 = vmatpush1.xpose.msra.mxu0 0.0
    %232 = vmatprep.subr.mxu0 0.0
    %233 = vmatpush1.xpose.msra.mxu0 0.0
    %234 = vmatprep.subr.mxu0 0.0
    %235 = vmatpush1.xpose.msra.mxu0 0.0
    %236 = vmatprep.subr.mxu0 0.0
    %237 = vmatpush1.xpose.msra.mxu0 0.0
    %238 = vmatprep.subr.mxu0 0.0
    %239 = vmatpush1.xpose.msra.mxu0 0.0
    %240 = vmatprep.subr.mxu0 0.0
    %241 = vmatpush1.xpose.msra.mxu0 0.0
    %242 = vmatprep.subr.mxu0 0.0
    %243 = vmatpush1.xpose.msra.mxu0 0.0
    %244 = vmatprep.subr.mxu0 0.0
    %245 = vmatpush1.xpose.msra.mxu0 0.0
    %246 = vmatprep.subr.mxu0 0.0
    %247 = vmatpush1.xpose.msra.mxu0 0.0
    %248 = vmatprep.subr.mxu0 0.0
    %249 = vmatpush1.xpose.msra.mxu0 0.0
    %250 = vmatprep.subr.mxu0 0.0
    %251 = vmatpush1.xpose.msra.mxu0 0.0
    %252 = vmatprep.mubr.f32.mxu0 %v53
    %253 = vmatmul.mubr.f32.gmra.mrb[0].mxu0 %v52
    %v254 = vpop.f32.mrb[0].mxu0
    %v255 = vadd.f32 0.0, %v254
    %v256 = vpop.f32.mrb[0].mxu0
    %257 = vdwg.mxu0
    %258 = vmatprep.subr.mxu0 %v63
    %259 = vmatpush1.xpose.msra.mxu0 %v62
    %260 = vmatprep.subr.mxu0 %v71
    %261 = vmatpush1.xpose.msra.mxu0 %v70
    %262 = vmatprep.subr.mxu0 %v79
    %263 = vmatpush1.xpose.msra.mxu0 %v78
    %264 = vmatprep.subr.mxu0 %v87
    %265 = vmatpush1.xpose.msra.mxu0 %v86
    %266 = vmatprep.subr.mxu0 %v95
    %267 = vmatpush1.xpose.msra.mxu0 %v94
    %268 = vmatprep.subr.mxu0 %v103
    %269 = vmatpush1.xpose.msra.mxu0 %v102
    %270 = vmatprep.subr.mxu0 %v111
    %271 = vmatpush1.xpose.msra.mxu0 %v110
    %272 = vmatprep.subr.mxu0 %v119
    %273 = vmatpush1.xpose.msra.mxu0 %v118
    %274 = vmatprep.subr.mxu0 %v127
    %275 = vmatpush1.xpose.msra.mxu0 %v126
    %276 = vmatprep.subr.mxu0 %v135
    %277 = vmatpush1.xpose.msra.mxu0 %v134
    %278 = vmatprep.subr.mxu0 %v143
    %279 = vmatpush1.xpose.msra.mxu0 %v142
    %280 = vmatprep.subr.mxu0 %v151
    %281 = vmatpush1.xpose.msra.mxu0 %v150
    %282 = vmatprep.subr.mxu0 %v159
    %283 = vmatpush1.xpose.msra.mxu0 %v158
    %284 = vmatprep.subr.mxu0 %v167
    %285 = vmatpush1.xpose.msra.mxu0 %v166
    %286 = vmatprep.subr.mxu0 %v175
    %287 = vmatpush1.xpose.msra.mxu0 %v174
    %288 = vmatprep.subr.mxu0 %v183
    %289 = vmatpush1.xpose.msra.mxu0 %v182
    %290 = vmatprep.subr.mxu0 0.0
    %291 = vmatpush1.xpose.msra.mxu0 0.0
    %292 = vmatprep.subr.mxu0 0.0
    %293 = vmatpush1.xpose.msra.mxu0 0.0
    %294 = vmatprep.subr.mxu0 0.0
    %295 = vmatpush1.xpose.msra.mxu0 0.0
    %296 = vmatprep.subr.mxu0 0.0
    %297 = vmatpush1.xpose.msra.mxu0 0.0
    %298 = vmatprep.subr.mxu0 0.0
    %299 = vmatpush1.xpose.msra.mxu0 0.0
    %300 = vmatprep.subr.mxu0 0.0
    %301 = vmatpush1.xpose.msra.mxu0 0.0
    %302 = vmatprep.subr.mxu0 0.0
    %303 = vmatpush1.xpose.msra.mxu0 0.0
    %304 = vmatprep.subr.mxu0 0.0
    %305 = vmatpush1.xpose.msra.mxu0 0.0
    %306 = vmatprep.subr.mxu0 0.0
    %307 = vmatpush1.xpose.msra.mxu0 0.0
    %308 = vmatprep.subr.mxu0 0.0
    %309 = vmatpush1.xpose.msra.mxu0 0.0
    %310 = vmatprep.subr.mxu0 0.0
    %311 = vmatpush1.xpose.msra.mxu0 0.0
    %312 = vmatprep.subr.mxu0 0.0
    %313 = vmatpush1.xpose.msra.mxu0 0.0
    %314 = vmatprep.subr.mxu0 0.0
    %315 = vmatpush1.xpose.msra.mxu0 0.0
    %316 = vmatprep.subr.mxu0 0.0
    %317 = vmatpush1.xpose.msra.mxu0 0.0
    %318 = vmatprep.subr.mxu0 0.0
    %319 = vmatpush1.xpose.msra.mxu0 0.0
    %320 = vmatprep.subr.mxu0 0.0
    %321 = vmatpush1.xpose.msra.mxu0 0.0
    %322 = vmatprep.mubr.f32.mxu0 %v55
    %323 = vmatmul.mubr.f32.gmra.mrb[0].mxu0 %v54
    %v324 = vpop.f32.mrb[0].mxu0
    %v325 = vadd.f32 %v255, %v324
    %v326 = vpop.f32.mrb[0].mxu0
    %327 = vdwg.mxu0
    %328 = vmatprep.subr.mxu0 %v65
    %329 = vmatpush1.xpose.msra.mxu0 %v64
    %330 = vmatprep.subr.mxu0 %v73
    %331 = vmatpush1.xpose.msra.mxu0 %v72
    %332 = vmatprep.subr.mxu0 %v81
    %333 = vmatpush1.xpose.msra.mxu0 %v80
    %334 = vmatprep.subr.mxu0 %v89
    %335 = vmatpush1.xpose.msra.mxu0 %v88
    %336 = vmatprep.subr.mxu0 %v97
    %337 = vmatpush1.xpose.msra.mxu0 %v96
    %338 = vmatprep.subr.mxu0 %v105
    %339 = vmatpush1.xpose.msra.mxu0 %v104
    %340 = vmatprep.subr.mxu0 %v113
    %341 = vmatpush1.xpose.msra.mxu0 %v112
    %342 = vmatprep.subr.mxu0 %v121
    %343 = vmatpush1.xpose.msra.mxu0 %v120
    %344 = vmatprep.subr.mxu0 %v129
    %345 = vmatpush1.xpose.msra.mxu0 %v128
    %346 = vmatprep.subr.mxu0 %v137
    %347 = vmatpush1.xpose.msra.mxu0 %v136
    %348 = vmatprep.subr.mxu0 %v145
    %349 = vmatpush1.xpose.msra.mxu0 %v144
    %350 = vmatprep.subr.mxu0 %v153
    %351 = vmatpush1.xpose.msra.mxu0 %v152
    %352 = vmatprep.subr.mxu0 %v161
    %353 = vmatpush1.xpose.msra.mxu0 %v160
    %354 = vmatprep.subr.mxu0 %v169
    %355 = vmatpush1.xpose.msra.mxu0 %v168
    %356 = vmatprep.subr.mxu0 %v177
    %357 = vmatpush1.xpose.msra.mxu0 %v176
    %358 = vmatprep.subr.mxu0 %v185
    %359 = vmatpush1.xpose.msra.mxu0 %v184
    %360 = vmatprep.subr.mxu0 0.0
    %361 = vmatpush1.xpose.msra.mxu0 0.0
    %362 = vmatprep.subr.mxu0 0.0
    %363 = vmatpush1.xpose.msra.mxu0 0.0
    %364 = vmatprep.subr.mxu0 0.0
    %365 = vmatpush1.xpose.msra.mxu0 0.0
    %366 = vmatprep.subr.mxu0 0.0
    %367 = vmatpush1.xpose.msra.mxu0 0.0
    %368 = vmatprep.subr.mxu0 0.0
    %369 = vmatpush1.xpose.msra.mxu0 0.0
    %370 = vmatprep.subr.mxu0 0.0
    %371 = vmatpush1.xpose.msra.mxu0 0.0
    %372 = vmatprep.subr.mxu0 0.0
    %373 = vmatpush1.xpose.msra.mxu0 0.0
    %374 = vmatprep.subr.mxu0 0.0
    %375 = vmatpush1.xpose.msra.mxu0 0.0
    %376 = vmatprep.subr.mxu0 0.0
    %377 = vmatpush1.xpose.msra.mxu0 0.0
    %378 = vmatprep.subr.mxu0 0.0
    %379 = vmatpush1.xpose.msra.mxu0 0.0
    %380 = vmatprep.subr.mxu0 0.0
    %381 = vmatpush1.xpose.msra.mxu0 0.0
    %382 = vmatprep.subr.mxu0 0.0
    %383 = vmatpush1.xpose.msra.mxu0 0.0
    %384 = vmatprep.subr.mxu0 0.0
    %385 = vmatpush1.xpose.msra.mxu0 0.0
    %386 = vmatprep.subr.mxu0 0.0
    %387 = vmatpush1.xpose.msra.mxu0 0.0
    %388 = vmatprep.subr.mxu0 0.0
    %389 = vmatpush1.xpose.msra.mxu0 0.0
    %390 = vmatprep.subr.mxu0 0.0
    %391 = vmatpush1.xpose.msra.mxu0 0.0
    %392 = vmatprep.mubr.f32.mxu0 %v57
    %393 = vmatmul.mubr.f32.gmra.mrb[0].mxu0 %v56
    %v394 = vpop.f32.mrb[0].mxu0
    %v395 = vadd.f32 %v325, %v394
    %v396 = vpop.f32.mrb[0].mxu0
    %397 = vdwg.mxu0
    %398 = vmatprep.subr.mxu0 %v67
    %399 = vmatpush1.xpose.msra.mxu0 %v66
    %400 = vmatprep.subr.mxu0 %v75
    %401 = vmatpush1.xpose.msra.mxu0 %v74
    %402 = vmatprep.subr.mxu0 %v83
    %403 = vmatpush1.xpose.msra.mxu0 %v82
    %404 = vmatprep.subr.mxu0 %v91
    %405 = vmatpush1.xpose.msra.mxu0 %v90
    %406 = vmatprep.subr.mxu0 %v99
    %407 = vmatpush1.xpose.msra.mxu0 %v98
    %408 = vmatprep.subr.mxu0 %v107
    %409 = vmatpush1.xpose.msra.mxu0 %v106
    %410 = vmatprep.subr.mxu0 %v115
    %411 = vmatpush1.xpose.msra.mxu0 %v114
    %412 = vmatprep.subr.mxu0 %v123
    %413 = vmatpush1.xpose.msra.mxu0 %v122
    %414 = vmatprep.subr.mxu0 %v131
    %415 = vmatpush1.xpose.msra.mxu0 %v130
    %416 = vmatprep.subr.mxu0 %v139
    %417 = vmatpush1.xpose.msra.mxu0 %v138
    %418 = vmatprep.subr.mxu0 %v147
    %419 = vmatpush1.xpose.msra.mxu0 %v146
    %420 = vmatprep.subr.mxu0 %v155
    %421 = vmatpush1.xpose.msra.mxu0 %v154
    %422 = vmatprep.subr.mxu0 %v163
    %423 = vmatpush1.xpose.msra.mxu0 %v162
    %424 = vmatprep.subr.mxu0 %v171
    %425 = vmatpush1.xpose.msra.mxu0 %v170
    %426 = vmatprep.subr.mxu0 %v179
    %427 = vmatpush1.xpose.msra.mxu0 %v178
    %428 = vmatprep.subr.mxu0 %v187
    %429 = vmatpush1.xpose.msra.mxu0 %v186
    %430 = vmatprep.subr.mxu0 0.0
    %431 = vmatpush1.xpose.msra.mxu0 0.0
    %432 = vmatprep.subr.mxu0 0.0
    %433 = vmatpush1.xpose.msra.mxu0 0.0
    %434 = vmatprep.subr.mxu0 0.0
    %435 = vmatpush1.xpose.msra.mxu0 0.0
    %436 = vmatprep.subr.mxu0 0.0
    %437 = vmatpush1.xpose.msra.mxu0 0.0
    %438 = vmatprep.subr.mxu0 0.0
    %439 = vmatpush1.xpose.msra.mxu0 0.0
    %440 = vmatprep.subr.mxu0 0.0
    %441 = vmatpush1.xpose.msra.mxu0 0.0
    %442 = vmatprep.subr.mxu0 0.0
    %443 = vmatpush1.xpose.msra.mxu0 0.0
    %444 = vmatprep.subr.mxu0 0.0
    %445 = vmatpush1.xpose.msra.mxu0 0.0
    %446 = vmatprep.subr.mxu0 0.0
    %447 = vmatpush1.xpose.msra.mxu0 0.0
    %448 = vmatprep.subr.mxu0 0.0
    %449 = vmatpush1.xpose.msra.mxu0 0.0
    %450 = vmatprep.subr.mxu0 0.0
    %451 = vmatpush1.xpose.msra.mxu0 0.0
    %452 = vmatprep.subr.mxu0 0.0
    %453 = vmatpush1.xpose.msra.mxu0 0.0
    %454 = vmatprep.subr.mxu0 0.0
    %455 = vmatpush1.xpose.msra.mxu0 0.0
    %456 = vmatprep.subr.mxu0 0.0
    %457 = vmatpush1.xpose.msra.mxu0 0.0
    %458 = vmatprep.subr.mxu0 0.0
    %459 = vmatpush1.xpose.msra.mxu0 0.0
    %460 = vmatprep.subr.mxu0 0.0
    %461 = vmatpush1.xpose.msra.mxu0 0.0
    %462 = vmatprep.mubr.f32.mxu0 %v59
    %463 = vmatmul.mubr.f32.gmra.mrb[0].mxu0 %v58
    %v464 = vpop.f32.mrb[0].mxu0
    %v465 = vadd.f32 %v395, %v464
    %v466 = vpop.f32.mrb[0].mxu0
    %467 = vdwg.mxu0
    %v468 = vld [vmem:[%s2] sm:$0xff]
    %v469 = vld [vmem:[%s3] sm:$0x1]
    %471 = vset.pattern.permute.xlu0 0
    %472 = vperm.xlu0 %471, %v468
    %v473 = vpop.permute.xlu0 %472
    %v476 = vlaneseq
    %v477 = vshrl.u32 %v476, 7
    %v478 = vsub.s32 0, %v477
    %v479 = vrot.slane %v469, %v478
    %v481 = vadd.f32 %v473, %v479
    %v482 = vmul.f32 %v465, 2.0
    %v483 = vsub.f32 %v481, %v482
    %v484 = vmax.f32 %v483, 0.0
    %v485 = vlaneseq
    %v486 = vshrl.u32 %v485, 7
    %s487 = smul.u32 0, 8
    %v488 = vstv %s487
    %v489 = vadd.s32 %v486, %v488
    %v490 = vlaneseq
    %v491 = vand.u32 %v490, 127
    %s492 = smul.u32 0, 128
    %v493 = vstv %s492
    %v494 = vadd.s32 %v491, %v493
    %v495 = vadd.s32 %v494, 4
    %vm496 = vcmp.eq.s32.totalorder %v489, %v495
    %vm497 = vcmp.ge.s32.totalorder %v494, 8
    %vm498 = vmor %vm496, %vm497
    %v499 = vsel %vm498, inf, %v484
    %v500 = vld [vmem:[#allocation2] sm:$0xff]
    %501 = vmin.xlane.f32.xlu0 %v499
    %v502 = vpop.xlane.xlu0 %501
    %v503 = vmin.f32 %v500, %v502
    %vm504 = vcmask 7168
    %505 = vst.msk [vmem:[#allocation2] sm:$0xff] %vm504, %v503
    // Predicated region
    $region34: #{tpu_custom_call.1} parent=1 // pred_check
      %p506 = pneg %p46
    $region35: #{tpu_custom_call.1} parent=1 // pred_check_branch
      %508 = sbr.rel (%p506) target = $region37
    $region36: #{tpu_custom_call.1} parent=1 // pred_region
      %v509 = vld [vmem:[#allocation2] sm:$0xff]
      %v510 = vrsqrt.pop %v509
      %v511 = vmul.f32 %v509, %v510
      %vm512 = vcmp.eq.f32.partialorder %v509, inf
      %v513 = vsel %vm512, %v509, %v511
      %vm514 = vcmp.eq.f32.partialorder %v509, 0.0
      %v515 = vand.u32 %v509, 2147483648
      %v516 = vsel %vm514, %v515, %v513
      %v517 = vld [vmem:[%s4] sm:$0xff]
      %v518 = vmin.f32 %v516, %v517
      %519 = vst.msk [vmem:[%s5] sm:$0xff] %vm504, %v518
    $region37: #{tpu_custom_call.1} parent=1 // pred_fallthru
      _
    // Predicated region
    $region38: #{tpu_custom_call.1} parent=1 // pred_check
      _
    $region39: #{tpu_custom_call.1} parent=1 // pred_check_branch
      %521 = sbr.rel (0) target = $region41
    $region40: #{tpu_custom_call.1} parent=1 // pred_region
      _
    $region41: #{tpu_custom_call.1} parent=1 // pred_fallthru
      _
    // Predicated region
    $region42: #{tpu_custom_call.1} parent=1 // pred_check
      _
    $region43: #{tpu_custom_call.1} parent=1 // pred_check_branch
      %523 = sbr.rel (0) target = $region45
    $region44: #{tpu_custom_call.1} parent=1 // pred_region
      _
    $region45: #{tpu_custom_call.1} parent=1 // pred_fallthru
      _
    %524 = vsyncpa [#allocation4], 1
    %525 = vsyncpa [#allocation6], 1

</llo_original>
